<compile_context>
chip_gen: v7x
topology: tpu7x:2x2x1
jax: 0.10.0
libtpu: 0.0.40
codegen_flags: <defaults>
</compile_context>

<pallas_src>
import math

import jax
import jax.numpy as jnp
from jax.experimental import pallas as pl
from jax.experimental.pallas import tpu as pltpu

THRESH = 0.5
LEAK = 1.0
# TODO(synk): quant_u=True path (u_q / b_q membrane quantizers) not
# implemented — default module config has quant_u=False, so share/beta/bias
# are unused here. Backward surrogate gradient is also out of scope (forward
# only).


def _lif_seq_kernel(s_ref, mem0_ref, spike_ref, newmem_ref):
    """One (row_tile, t) grid step. newmem_ref is the VMEM-resident membrane
    accumulator (same block index for all t), written back to HBM only once
    per row tile."""
    t = pl.program_id(1)

    @pl.when(t == 0)
    def _init():
        newmem_ref[...] = mem0_ref[...].astype(newmem_ref.dtype)

    h = s_ref[...].astype(jnp.float32) + newmem_ref[...]
    hm = h - THRESH
    spike = hm > 0.0                       # forward value of surrogate spike
    u = jnp.where(spike, hm, h)            # soft reset: H - spike*thresh
    if LEAK != 1.0:                        # dead multiply elided at trace time
        u = u * LEAK
    spike_ref[...] = spike.astype(spike_ref.dtype)
    newmem_ref[...] = u.astype(newmem_ref.dtype)


def _plan(n, itemsize, block_bytes):
    """Factor n elements per timestep into (rows, lanes) + tail and pick a
    row-tile size.  lanes is a multiple of 128; rows kept >= sublane pack when
    possible (dense vregs, unmasked stores); prefers a layout with >= 2 row
    tiles so v7x can use both TensorCores."""
    sub = 8 * max(1, 4 // itemsize)        # f32 -> 8, bf16 -> 16, int8 -> 32
    lanes = 128
    for cand in (2048, 1024, 512, 256, 128):   # prefer >= 2 tiles worth of rows
        if (n // cand) >= 2 * sub:
            lanes = cand
            break
    else:
        for cand in (2048, 1024, 512, 256, 128):  # else at least a full vreg
            if (n // cand) >= sub:
                lanes = cand
                break

    rows = n // lanes
    tail = n - rows * lanes
    if rows == 0:
        return 0, lanes, 0, tail
    if rows <= sub:
        return rows, lanes, rows, tail     # single full-extent block (legal)

    tile_r = max(sub, block_bytes // (lanes * itemsize))
    tile_r = (tile_r // sub) * sub
    tile_r = min(tile_r, rows)
    if tile_r >= rows and rows >= 2 * sub:
        # Don't collapse to a single block: split so the parallel axis has >=2
        # entries (v7x megacore sharding).
        tile_r = ((rows // 2 + sub - 1) // sub) * sub
    return rows, lanes, tile_r, tail


def lif_spike_sequence(s_seq, membrane_potential=None, *, spike_dtype=None,
                       block_bytes=2 << 20):
    """Fused LIF over a leading time axis.

    s_seq: (T, ...) input currents.  Returns (spikes (T, ...),
    final_membrane (...) in float32)."""
    T = s_seq.shape[0]
    inner_shape = s_seq.shape[1:]
    n = math.prod(inner_shape)
    dtype = s_seq.dtype
    spike_dtype = dtype if spike_dtype is None else jnp.dtype(spike_dtype)
    itemsize = jnp.dtype(dtype).itemsize

    if membrane_potential is None:
        mem0 = jnp.zeros((n,), jnp.float32)
    else:
        mem0 = membrane_potential.reshape(n)

    s_flat = s_seq.reshape(T, n)

    rows, lanes, tile_r, tail = _plan(n, itemsize, block_bytes)
    n_bulk = rows * lanes

    spike_parts, mem_parts = [], []

    if rows > 0:
        if tail == 0:                       # common case: zero-copy reshape
            s_bulk = s_flat.reshape(T, rows, lanes)
            m_bulk = mem0.reshape(rows, lanes)
        else:
            s_bulk = s_flat[:, :n_bulk].reshape(T, rows, lanes)
            m_bulk = mem0[:n_bulk].reshape(rows, lanes)

        grid = (pl.cdiv(rows, tile_r), T)

        s_spec = pl.BlockSpec((None, tile_r, lanes), lambda i, t: (t, i, 0))
        m_spec = pl.BlockSpec((tile_r, lanes), lambda i, t: (i, 0))
        spike_spec = pl.BlockSpec((None, tile_r, lanes), lambda i, t: (t, i, 0))
        newmem_spec = pl.BlockSpec((tile_r, lanes), lambda i, t: (i, 0))

        # Live VMEM: 2 buffers each for s, spike, mem0, newmem blocks.
        blk_elems = tile_r * lanes
        live_bytes = blk_elems * 2 * (itemsize
                                      + jnp.dtype(spike_dtype).itemsize
                                      + jnp.dtype(m_bulk.dtype).itemsize
                                      + 4)                      # newmem f32
        vmem_limit = int(min(max(2 * live_bytes, 16 << 20), 64 << 20))

        # Alias membrane input to the final-membrane output when dtypes match
        # (read-modify-write state buffer; only saves HBM if donated).
        io_aliases = {1: 1} if m_bulk.dtype == jnp.float32 else {}

        spike_bulk, newmem_bulk = pl.pallas_call(
            _lif_seq_kernel,
            out_shape=(jax.ShapeDtypeStruct((T, rows, lanes), spike_dtype),
                       jax.ShapeDtypeStruct((rows, lanes), jnp.float32)),
            grid=grid,
            in_specs=[s_spec, m_spec],
            out_specs=(spike_spec, newmem_spec),
            input_output_aliases=io_aliases,
            compiler_params=pltpu.CompilerParams(
                dimension_semantics=("parallel", "arbitrary"),
                vmem_limit_bytes=vmem_limit),
        )(s_bulk, m_bulk)

        spike_parts.append(spike_bulk.reshape(T, n_bulk))
        mem_parts.append(newmem_bulk.reshape(n_bulk))

    if tail > 0:
        # < 128 leftover elements per timestep: tiny pure-jnp scan (cheaper
        # than padding the whole array and re-slicing it).
        s_tail = s_flat[:, n_bulk:]
        m_tail = mem0[n_bulk:].astype(jnp.float32)

        def step(mem, s_t):
            h = s_t.astype(jnp.float32) + mem
            spk = h - THRESH > 0.0
            u = jnp.where(spk, h - THRESH, h)
            if LEAK != 1.0:
                u = u * LEAK
            return u, spk.astype(spike_dtype)

        mem_tail_out, spike_tail = jax.lax.scan(step, m_tail, s_tail)
        spike_parts.append(spike_tail)
        mem_parts.append(mem_tail_out)

    spikes = (spike_parts[0] if len(spike_parts) == 1
              else jnp.concatenate(spike_parts, axis=1))
    new_mem = (mem_parts[0] if len(mem_parts) == 1
               else jnp.concatenate(mem_parts, axis=0))
    return spikes.reshape((T,) + tuple(inner_shape)), new_mem.reshape(inner_shape)


def lif_spike_forward(s, membrane_potential=None, share=False, beta=None,
                      bias=None, *, spike_dtype=None, block_bytes=2 << 20):
    """Single-timestep LIFSpike.forward (functional).

    Returns (spike, new_membrane_potential).  new membrane is float32
    regardless of input dtype (state kept at full precision)."""
    del share, beta, bias      # only used by the quant_u=True path (not impl.)
    spikes, new_mem = lif_spike_sequence(s[None], membrane_potential,
                                         spike_dtype=spike_dtype,
                                         block_bytes=block_bytes)
    return spikes[0], new_mem


# ---------------------------------------------------------------------------
# Pure-JAX references for verification.
# ---------------------------------------------------------------------------
def _lif_reference_step(s, mem):
    h = s.astype(jnp.float32) + mem
    spike = (h - THRESH > 0.0).astype(jnp.float32)
    u = (h - spike * THRESH) * LEAK
    return spike, u


def _lif_reference_seq(s_seq, mem0):
    mem = mem0.astype(jnp.float32)
    spikes = []
    for t in range(s_seq.shape[0]):
        spk, mem = _lif_reference_step(s_seq[t], mem)
        spikes.append(spk)
    return jnp.stack(spikes), mem


if __name__ == "__main__":
    key = jax.random.PRNGKey(0)
    T, B, C, H, W = 4, 2, 4, 16, 16             # small NCHW conv activation
    x_seq = jax.random.normal(key, (T, B, C, H, W), dtype=jnp.float32)

    # ---- fused time loop (the main path) ----
    spikes, mem_final = lif_spike_sequence(x_seq)
    jax.block_until_ready((spikes, mem_final))
    ref_spikes, ref_mem = _lif_reference_seq(x_seq, jnp.zeros((B, C, H, W)))
    assert jnp.array_equal(spikes.astype(jnp.float32), ref_spikes), \
        "fused spike mismatch"
    assert jnp.allclose(mem_final, ref_mem, atol=1e-6), \
        "fused membrane mismatch"

    # ---- single-step API, state carried explicitly across two calls ----
    x = x_seq[0]
    s1, m1 = lif_spike_forward(x, membrane_potential=None,
                               share=False, beta=None, bias=None)
    s2, m2 = lif_spike_forward(x, membrane_potential=m1,
                               share=False, beta=None, bias=None)
    jax.block_until_ready((s1, m1, s2, m2))
    r1s, r1m = _lif_reference_step(x, jnp.zeros_like(x))
    r2s, r2m = _lif_reference_step(x, r1m)
    assert jnp.array_equal(s1.astype(jnp.float32), r1s), "spike mismatch (t=1)"
    assert jnp.allclose(m1, r1m, atol=1e-6), "membrane mismatch (t=1)"
    assert jnp.array_equal(s2.astype(jnp.float32), r2s), "spike mismatch (t=2)"
    assert jnp.allclose(m2, r2m, atol=1e-6), "membrane mismatch (t=2)"

    # ---- bf16 inputs (membrane still tracked in f32 inside VMEM) ----
    xb_seq = x_seq.astype(jnp.bfloat16)
    sb, mb = lif_spike_sequence(xb_seq)
    jax.block_until_ready((sb, mb))
    rb_s, rb_m = _lif_reference_seq(xb_seq, jnp.zeros((B, C, H, W)))
    assert jnp.array_equal(sb.astype(jnp.float32), rb_s), "bf16 spike mismatch"
    assert jnp.allclose(mb, rb_m, atol=1e-5), "bf16 membrane mismatch"

    # ---- narrow spike output dtype (0/1 exact in bf16) ----
    sn, mn = lif_spike_sequence(x_seq, spike_dtype=jnp.bfloat16)
    jax.block_until_ready((sn, mn))
    assert jnp.array_equal(sn.astype(jnp.float32), ref_spikes), \
        "narrow-spike-dtype mismatch"

    # ---- awkward size (no 128-multiple factor): bulk kernel + jnp tail ----
    x_odd = jax.random.normal(jax.random.PRNGKey(0), (2, 2, 10, 15),
                              dtype=jnp.float32)     # 300 elems / timestep
    so, mo = lif_spike_sequence(x_odd)
    jax.block_until_ready((so, mo))
    ro_s, ro_m = _lif_reference_seq(x_odd, jnp.zeros(x_odd.shape[1:]))
    assert jnp.array_equal(so.astype(jnp.float32), ro_s), "odd-size spike mismatch"
    assert jnp.allclose(mo, ro_m, atol=1e-6), "odd-size membrane mismatch"

    print("KERNEL_OK")
</pallas_src>

<mosaic_0001>
module attributes {stable_mosaic.version = 11 : i64} {
  func.func @_lif_seq_kernel(%arg0: i32, %arg1: i32, %arg2: memref<1x8x128xf32, #tpu.memory_space<vmem>>, %arg3: memref<8x128xf32, #tpu.memory_space<vmem>>, %arg4: memref<1x8x128xf32, #tpu.memory_space<vmem>>, %arg5: memref<8x128xf32, #tpu.memory_space<vmem>>) attributes {dimension_semantics = [#tpu.dimension_semantics<parallel>, #tpu.dimension_semantics<arbitrary>], iteration_bounds = array<i64: 2, 4>, scalar_prefetch = 0 : i64, scratch_operands = 0 : i64, tpu.core_type = #tpu.core_type<tc>, window_params = [{transform_indices = @transform_0, window_bounds = array<i64: 1, 8, 128>}, {transform_indices = @transform_1, window_bounds = array<i64: 8, 128>}, {transform_indices = @transform_2, window_bounds = array<i64: 1, 8, 128>}, {transform_indices = @transform_3, window_bounds = array<i64: 8, 128>}]} {
    %c0_i32 = arith.constant 0 : i32
    %0 = arith.cmpi eq, %arg1, %c0_i32 : i32
    %1 = arith.extui %0 : i1 to i32
    %c0_i32_0 = arith.constant 0 : i32
    %2 = arith.cmpi ne, %1, %c0_i32_0 : i32
    scf.if %2 {
      %c0_11 = arith.constant 0 : index
      %c0_12 = arith.constant 0 : index
      %18 = vector.load %arg3[%c0_11, %c0_12] : memref<8x128xf32, #tpu.memory_space<vmem>>, vector<8x128xf32>
      %c0_13 = arith.constant 0 : index
      %c0_14 = arith.constant 0 : index
      %19 = vector.load %arg5[%c0_13, %c0_14] : memref<8x128xf32, #tpu.memory_space<vmem>>, vector<8x128xf32>
      tpu.vector_store %arg5[%c0_13, %c0_14], %18 {strides = array<i32>} : memref<8x128xf32, #tpu.memory_space<vmem>>, vector<8x128xf32>,
    } else {
    }
    %c0 = arith.constant 0 : index
    %c0_1 = arith.constant 0 : index
    %c0_2 = arith.constant 0 : index
    %3 = vector.load %arg2[%c0, %c0_1, %c0_2] : memref<1x8x128xf32, #tpu.memory_space<vmem>>, vector<1x8x128xf32>
    %4 = vector.shape_cast %3 : vector<1x8x128xf32> to vector<8x128xf32>
    %c0_3 = arith.constant 0 : index
    %c0_4 = arith.constant 0 : index
    %5 = vector.load %arg5[%c0_3, %c0_4] : memref<8x128xf32, #tpu.memory_space<vmem>>, vector<8x128xf32>
    %6 = arith.addf %4, %5 : vector<8x128xf32>
    %cst = arith.constant 5.000000e-01 : f32
    %7 = vector.broadcast %cst : f32 to vector<8x128xf32>
    %8 = arith.subf %6, %7 : vector<8x128xf32>
    %cst_5 = arith.constant 0.000000e+00 : f32
    %9 = vector.broadcast %cst_5 : f32 to vector<8x128xf32>
    %10 = arith.cmpf ogt, %8, %9 : vector<8x128xf32>
    %11 = arith.select %10, %8, %6 : vector<8x128xi1>, vector<8x128xf32>
    %12 = arith.extui %10 : vector<8x128xi1> to vector<8x128xi32>
    %13 = arith.sitofp %12 : vector<8x128xi32> to vector<8x128xf32>
    %c0_6 = arith.constant 0 : index
    %c0_7 = arith.constant 0 : index
    %c0_8 = arith.constant 0 : index
    %14 = vector.load %arg4[%c0_6, %c0_7, %c0_8] : memref<1x8x128xf32, #tpu.memory_space<vmem>>, vector<1x8x128xf32>
    %15 = vector.shape_cast %14 : vector<1x8x128xf32> to vector<8x128xf32>
    %16 = vector.shape_cast %13 : vector<8x128xf32> to vector<1x8x128xf32>
    tpu.vector_store %arg4[%c0_6, %c0_7, %c0_8], %16 {strides = array<i32>} : memref<1x8x128xf32, #tpu.memory_space<vmem>>, vector<1x8x128xf32>,
    %c0_9 = arith.constant 0 : index
    %c0_10 = arith.constant 0 : index
    %17 = vector.load %arg5[%c0_9, %c0_10] : memref<8x128xf32, #tpu.memory_space<vmem>>, vector<8x128xf32>
    tpu.vector_store %arg5[%c0_9, %c0_10], %11 {strides = array<i32>} : memref<8x128xf32, #tpu.memory_space<vmem>>, vector<8x128xf32>,
    return
  }
  func.func @transform_0(%arg0: i32, %arg1: i32) -> (i32, i32, i32) {
    %c0_i32 = arith.constant 0 : i32
    %c0_i32_0 = arith.constant 0 : i32
    return %arg1, %arg0, %c0_i32 : i32, i32, i32
  }
  func.func @transform_1(%arg0: i32, %arg1: i32) -> (i32, i32) {
    %c0_i32 = arith.constant 0 : i32
    %c0_i32_0 = arith.constant 0 : i32
    return %arg0, %c0_i32 : i32, i32
  }
  func.func @transform_2(%arg0: i32, %arg1: i32) -> (i32, i32, i32) {
    %c0_i32 = arith.constant 0 : i32
    %c0_i32_0 = arith.constant 0 : i32
    return %arg1, %arg0, %c0_i32 : i32, i32, i32
  }
  func.func @transform_3(%arg0: i32, %arg1: i32) -> (i32, i32) {
    %c0_i32 = arith.constant 0 : i32
    %c0_i32_0 = arith.constant 0 : i32
    return %arg0, %c0_i32 : i32, i32
  }
}

</mosaic_0001>

<llo_original>
// kernel: tpu_custom_call.1
$region0: #{tpu_custom_call.1}
  #allocation0 [shape = 'u32[]', space=smem, size = 0x4, offset = 0x4, fixed_abs, tag = 'smem constant byte address 0x4 - core index']
  #allocation1 [shape = 'u32[144,128]{1,0:T(1,128)}', space=vmem, size = 0x12000, scoped, tag = 'internal scratch']
  %s0 = inlined_call_operand.hbm [shape: f32[4,16,128], index: 0, kind: input, shape index: {}]
  %s1 = inlined_call_operand.hbm [shape: f32[16,128], index: 1, kind: input, shape index: {}, may-alias: {1,3}]
  %s2 = inlined_call_operand.hbm [shape: f32[4,16,128], index: 2, kind: output, shape index: {0}]
  %s3 = inlined_call_operand.hbm [shape: f32[16,128], index: 3, kind: output, shape index: {1}, may-alias: {1,3}]
  %4 = xla_tuple %s2, %s3
  %s5 = sld [smem:[#allocation0]]
  $region61: #{tpu_custom_call.1} parent=0
    _
  %s7 = ssub.s32 1, %s5
  %s8 = scalar_select 0, %s7, %s5
  $region1: #{tpu_custom_call.1} parent=0
    #allocation2 [shape = 'u8[8192]{0}', space=vmem, size = 0x2000, scoped, tag = 'input window, operand 0']
    #allocation3 [shape = 's32[2]{0}', space=sflag, size = 0x8, scoped, tag = 'scoped memory for tpu_custom_call.1']
    #allocation4 [shape = 's32[2]{0}', space=sflag, size = 0x8, scoped, tag = 'scoped memory for tpu_custom_call.1']
    #allocation5 [shape = 'u8[8192]{0}', space=vmem, size = 0x2000, scoped, tag = 'input window, operand 1']
    #allocation6 [shape = 's32[2]{0}', space=sflag, size = 0x8, scoped, tag = 'scoped memory for tpu_custom_call.1']
    #allocation7 [shape = 'u8[8192]{0}', space=vmem, size = 0x2000, scoped, tag = 'output window, operand 0']
    #allocation8 [shape = 'u8[8192]{0}', space=vmem, size = 0x2000, scoped, tag = 'output window, operand 1']
    #allocation9 [shape = 's32[2]{0}', space=sflag, size = 0x8, scoped, tag = 'scoped memory for tpu_custom_call.1']
    %9 = vsyncpa [#allocation3], 0
    %s10 = scalar_lea.sflag [#allocation3], 1
    %11 = vsyncpa %s10, 0
    %12 = vsyncpa [#allocation6], 0
    %s13 = scalar_lea.sflag [#allocation6], 1
    %14 = vsyncpa %s13, 0
    %15 = vsyncpa [#allocation4], 0
    %s16 = scalar_lea.sflag [#allocation4], 1
    %17 = vsyncpa %s16, 0
    %18 = vsyncpa [#allocation9], 0
    %s19 = scalar_lea.sflag [#allocation9], 1
    %20 = vsyncpa %s19, 0
    loop: start=0, step=1, limit=10
    $region2: #{tpu_custom_call.1} parent=1 // loop_pre_header
      _
    $region3: #{tpu_custom_call.1} parent=1 // loop_header
      %s22 = sphi 0, %s26
      %p23 = scmp.ge.s32.totalorder %s22, 10
      %s29 = sphi 0, %s41
      %s30 = sphi 0, %s37
      %s31 = sphi 0, %s29
      %s32 = sphi 0, %s30
      %s33 = sphi 0, %s31
      %s34 = sphi 0, %s32
      %s46 = sphi 0, %s48
      %s49 = sphi 0, %s46
      %s50 = sphi 0, %s49
      %s66 = sphi 0, %s50
      %s72 = sphi 0, %s74
      %s75 = sphi 0, %s72
      %s76 = sphi 0, %s75
      %s92 = sphi 0, %s76
      %s100 = sphi 0, %s102
      %s103 = sphi 0, %s100
      %s104 = sphi 0, %s103
      %s120 = sphi 0, %s104
      %s126 = sphi 0, %s128
      %s129 = sphi 0, %s126
      %s130 = sphi 0, %s129
      %s146 = sphi 0, %s130
    $region4: #{tpu_custom_call.1} parent=1 // loop_header_branch
      %25 = sbr.rel (%p23) target = $region8
    $region5: #{tpu_custom_call.1} parent=1 // loop_body
      %s27 = ssub.s32 %s22, 1
      %s28 = ssub.s32 %s22, 2
      %s35 = sadd.s32 1, %s30
      %p36 = scmp.ge.s32.totalorder %s35, 4
      %s37 = scalar_select %p36, 0, %s35
      %s38 = sadd.s32 1, %s29
      %s39 = scalar_select %p36, %s38, %s29
      %p40 = scmp.ge.s32.totalorder %s39, 2
      %s41 = scalar_select %p40, 0, %s39
      %s42 = ssub.s32 %s30, %s37
      %s43 = ssub.s32 %s29, %s41
      %s44 = sor.u32 %s42, %s43
      %p45 = scmp.eq.s32.totalorder %s44, 0
      %s47 = sadd.s32 %s46, 1
      %s48 = scalar_select %p45, %s46, %s47
      %p51 = pneg %p45
      %p52 = scmp.eq.s32.totalorder %s22, 7
      %p53 = por %p51, %p52
      %p54 = scmp.ne.s32.totalorder %s46, %s49
      %p55 = scmp.eq.s32.totalorder %s22, 0
      %p56 = por %p54, %p55
      %p57 = scmp.ne.s32.totalorder %s46, %s49
      %p58 = scmp.eq.s32.totalorder %s27, 7
      %p59 = por %p57, %p58
      %p60 = scmp.ne.s32.totalorder %s49, %s50
      %p61 = scmp.eq.s32.totalorder %s27, 0
      %p62 = por %p60, %p61
      %p63 = scmp.ne.s32.totalorder %s49, %s50
      %p64 = scmp.eq.s32.totalorder %s28, 7
      %p65 = por %p63, %p64
      %p67 = scmp.ne.s32.totalorder %s50, %s66
      %p68 = scmp.eq.s32.totalorder %s28, 0
      %p69 = por %p67, %p68
      %s70 = ssub.s32 %s29, %s41
      %p71 = scmp.eq.s32.totalorder %s70, 0
      %s73 = sadd.s32 %s72, 1
      %s74 = scalar_select %p71, %s72, %s73
      %p77 = pneg %p71
      %p78 = scmp.eq.s32.totalorder %s22, 7
      %p79 = por %p77, %p78
      %p80 = scmp.ne.s32.totalorder %s72, %s75
      %p81 = scmp.eq.s32.totalorder %s22, 0
      %p82 = por %p80, %p81
      %p83 = scmp.ne.s32.totalorder %s72, %s75
      %p84 = scmp.eq.s32.totalorder %s27, 7
      %p85 = por %p83, %p84
      %p86 = scmp.ne.s32.totalorder %s75, %s76
      %p87 = scmp.eq.s32.totalorder %s27, 0
      %p88 = por %p86, %p87
      %p89 = scmp.ne.s32.totalorder %s75, %s76
      %p90 = scmp.eq.s32.totalorder %s28, 7
      %p91 = por %p89, %p90
      %p93 = scmp.ne.s32.totalorder %s76, %s92
      %p94 = scmp.eq.s32.totalorder %s28, 0
      %p95 = por %p93, %p94
      %s96 = ssub.s32 %s30, %s37
      %s97 = ssub.s32 %s29, %s41
      %s98 = sor.u32 %s96, %s97
      %p99 = scmp.eq.s32.totalorder %s98, 0
      %s101 = sadd.s32 %s100, 1
      %s102 = scalar_select %p99, %s100, %s101
      %p105 = pneg %p99
      %p106 = scmp.eq.s32.totalorder %s22, 7
      %p107 = por %p105, %p106
      %p108 = scmp.ne.s32.totalorder %s100, %s103
      %p109 = scmp.eq.s32.totalorder %s22, 0
      %p110 = por %p108, %p109
      %p111 = scmp.ne.s32.totalorder %s100, %s103
      %p112 = scmp.eq.s32.totalorder %s27, 7
      %p113 = por %p111, %p112
      %p114 = scmp.ne.s32.totalorder %s103, %s104
      %p115 = scmp.eq.s32.totalorder %s27, 0
      %p116 = por %p114, %p115
      %p117 = scmp.ne.s32.totalorder %s103, %s104
      %p118 = scmp.eq.s32.totalorder %s28, 7
      %p119 = por %p117, %p118
      %p121 = scmp.ne.s32.totalorder %s104, %s120
      %p122 = scmp.eq.s32.totalorder %s28, 0
      %p123 = por %p121, %p122
      %s124 = ssub.s32 %s29, %s41
      %p125 = scmp.eq.s32.totalorder %s124, 0
      %s127 = sadd.s32 %s126, 1
      %s128 = scalar_select %p125, %s126, %s127
      %p131 = pneg %p125
      %p132 = scmp.eq.s32.totalorder %s22, 7
      %p133 = por %p131, %p132
      %p134 = scmp.ne.s32.totalorder %s126, %s129
      %p135 = scmp.eq.s32.totalorder %s22, 0
      %p136 = por %p134, %p135
      %p137 = scmp.ne.s32.totalorder %s126, %s129
      %p138 = scmp.eq.s32.totalorder %s27, 7
      %p139 = por %p137, %p138
      %p140 = scmp.ne.s32.totalorder %s129, %s130
      %p141 = scmp.eq.s32.totalorder %s27, 0
      %p142 = por %p140, %p141
      %p143 = scmp.ne.s32.totalorder %s129, %s130
      %p144 = scmp.eq.s32.totalorder %s28, 7
      %p145 = por %p143, %p144
      %p147 = scmp.ne.s32.totalorder %s130, %s146
      %p148 = scmp.eq.s32.totalorder %s28, 0
      %p149 = por %p147, %p148
      %p150 = scmp.le.s32.totalorder 1, %s22
      %p151 = scmp.lt.s32.totalorder %s22, 9
      %p152 = pnand %p150, %p151
      %p153 = pneg %p152
      // Predicated region
      $region9: #{tpu_custom_call.1} parent=5 // pred_check
        _
      $region10: #{tpu_custom_call.1} parent=5 // pred_check_branch
        %155 = sbr.rel (%p152) target = $region12
      $region11: #{tpu_custom_call.1} parent=5 // pred_region
        %s156 = ssub.s32 %s22, 1
      $region12: #{tpu_custom_call.1} parent=5 // pred_fallthru
        _
      %p157 = scmp.lt.s32.totalorder %s22, 8
      // Predicated region
      $region13: #{tpu_custom_call.1} parent=5 // pred_check
        %p158 = pneg %p157
      $region14: #{tpu_custom_call.1} parent=5 // pred_check_branch
        %160 = sbr.rel (%p158) target = $region16
      $region15: #{tpu_custom_call.1} parent=5 // pred_region
        // Predicated region
        $region17: #{tpu_custom_call.1} parent=15 // pred_check
          %p161 = pneg %p56
        $region18: #{tpu_custom_call.1} parent=15 // pred_check_branch
          %163 = sbr.rel (%p161) target = $region20
        $region19: #{tpu_custom_call.1} parent=15 // pred_region
          %s164 = sand.u32 %s46, 1
          %s165 = scalar_lea.sflag [#allocation3], %s164
          %s166 = sand.u32 %s46, 1
          %s167 = smul.addr %s166, 8
          %s168 = scalar_lea.vmem [#allocation2], %s167
          %s170 = ssub.s32 128, 128
          %171 = vsyncadd %s165, %s170
          %s172 = smul.addr %s30, 2
          %s173 = sadd.s32 %s29, %s172
          %s174 = smul.addr %s173, 128
          %s175 = scalar_lea.hbm %s0, %s174
          %s177 = sshll.u32 %s168, 4
          %s178 = int_to_ptr.vmem [resolvable:$true] %s177
          %180 = dma.hbm_to_vmem [thread:$0]  %s175, 128, %s178, %s165
        $region20: #{tpu_custom_call.1} parent=15 // pred_fallthru
          _
        // Predicated region
        $region21: #{tpu_custom_call.1} parent=15 // pred_check
          %p181 = pneg %p82
        $region22: #{tpu_custom_call.1} parent=15 // pred_check_branch
          %183 = sbr.rel (%p181) target = $region24
        $region23: #{tpu_custom_call.1} parent=15 // pred_region
          %s184 = sand.u32 %s72, 1
          %s185 = scalar_lea.sflag [#allocation6], %s184
          %s186 = sand.u32 %s72, 1
          %s187 = smul.addr %s186, 8
          %s188 = scalar_lea.vmem [#allocation5], %s187
          %s190 = ssub.s32 128, 128
          %191 = vsyncadd %s185, %s190
          %s192 = smul.addr %s29, 128
          %s193 = scalar_lea.hbm %s1, %s192
          %s195 = sshll.u32 %s188, 4
          %s196 = int_to_ptr.vmem [resolvable:$true] %s195
          %198 = dma.hbm_to_vmem [thread:$0]  %s193, 128, %s196, %s185
        $region24: #{tpu_custom_call.1} parent=15 // pred_fallthru
          _
      $region16: #{tpu_custom_call.1} parent=5 // pred_fallthru
        _
      %p199 = scmp.le.s32.totalorder 1, %s22
      %p200 = scmp.lt.s32.totalorder %s22, 9
      %p201 = pnand %p199, %p200
      %p202 = pneg %p201
      // Predicated region
      $region25: #{tpu_custom_call.1} parent=5 // pred_check
        _
      $region26: #{tpu_custom_call.1} parent=5 // pred_check_branch
        %204 = sbr.rel (%p201) target = $region28
      $region27: #{tpu_custom_call.1} parent=5 // pred_region
        %s205 = ssub.s32 %s22, 1
        %s206 = sand.u32 %s49, 1
        %s207 = scalar_lea.sflag [#allocation3], %s206
        %s208 = sand.u32 %s49, 1
        %s209 = smul.addr %s208, 8
        %s210 = scalar_lea.vmem [#allocation2], %s209
        // Predicated region
        $region29: #{tpu_custom_call.1} parent=27 // pred_check
          %p211 = pneg %p62
        $region30: #{tpu_custom_call.1} parent=27 // pred_check_branch
          %213 = sbr.rel (%p211) target = $region32
        $region31: #{tpu_custom_call.1} parent=27 // pred_region
          %214 = dma.done %s207, 128
        $region32: #{tpu_custom_call.1} parent=27 // pred_fallthru
          _
        %s215 = sand.u32 %s75, 1
        %s216 = scalar_lea.sflag [#allocation6], %s215
        %s217 = sand.u32 %s75, 1
        %s218 = smul.addr %s217, 8
        %s219 = scalar_lea.vmem [#allocation5], %s218
        // Predicated region
        $region33: #{tpu_custom_call.1} parent=27 // pred_check
          %p220 = pneg %p88
        $region34: #{tpu_custom_call.1} parent=27 // pred_check_branch
          %222 = sbr.rel (%p220) target = $region36
        $region35: #{tpu_custom_call.1} parent=27 // pred_region
          %223 = dma.done %s216, 128
        $region36: #{tpu_custom_call.1} parent=27 // pred_fallthru
          _
        %s224 = sand.u32 %s49, 1
        %s225 = scalar_lea.sflag [#allocation3], %s224
        %s226 = sand.u32 %s49, 1
        %s227 = smul.addr %s226, 8
        %s228 = scalar_lea.vmem [#allocation2], %s227
        %p229 = pneg %p62
        %p230 = pneg %p59
        %s231 = sand.u32 %s75, 1
        %s232 = scalar_lea.sflag [#allocation6], %s231
        %s233 = sand.u32 %s75, 1
        %s234 = smul.addr %s233, 8
        %s235 = scalar_lea.vmem [#allocation5], %s234
        %p236 = pneg %p88
        %p237 = pneg %p85
        %p238 = pneg %p116
        %p239 = pneg %p113
        %s240 = sand.u32 %s103, 1
        %s241 = scalar_lea.sflag [#allocation4], %s240
        %s242 = sand.u32 %s103, 1
        %s243 = smul.addr %s242, 8
        %s244 = scalar_lea.vmem [#allocation7], %s243
        %p245 = pneg %p142
        %p246 = pneg %p139
        %s247 = sand.u32 %s129, 1
        %s248 = scalar_lea.sflag [#allocation9], %s247
        %s249 = sand.u32 %s129, 1
        %s250 = smul.addr %s249, 8
        %s251 = scalar_lea.vmem [#allocation8], %s250
        %p252 = scmp.eq.s32.totalorder %s32, 0
        // Predicated region
        $region37: #{tpu_custom_call.1} parent=27 // pred_check
          %p253 = pneg %p252
        $region38: #{tpu_custom_call.1} parent=27 // pred_check_branch
          %255 = sbr.rel (%p253) target = $region40
        $region39: #{tpu_custom_call.1} parent=27 // pred_region
          %v256 = vld [vmem:[%s219] sm:$0xff]
          %257 = vst [vmem:[%s251] sm:$0xff] %v256
        $region40: #{tpu_custom_call.1} parent=27 // pred_fallthru
          _
        %v258 = vld [vmem:[%s210] sm:$0xff]
        %v259 = vld [vmem:[%s251] sm:$0xff]
        %v260 = vadd.f32 %v258, %v259
        %v261 = vsub.f32 %v260, 0.5
        %vm262 = vcmp.gt.f32.partialorder %v261, 0.0
        %v263 = vsel %vm262, %v261, %v260
        %v264 = vsel %vm262, 1, 0
        %v265 = vcvt.s32.f32 %v264
        %266 = vst [vmem:[%s244] sm:$0xff] %v265
        %267 = vst [vmem:[%s251] sm:$0xff] %v263
        %s268 = sand.u32 %s103, 1
        %s269 = scalar_lea.sflag [#allocation4], %s268
        %s270 = sand.u32 %s103, 1
        %s271 = smul.addr %s270, 8
        %s272 = scalar_lea.vmem [#allocation7], %s271
        %s273 = sand.u32 %s129, 1
        %s274 = scalar_lea.sflag [#allocation9], %s273
        %s275 = sand.u32 %s129, 1
        %s276 = smul.addr %s275, 8
        %s277 = scalar_lea.vmem [#allocation8], %s276
        // Predicated region
        $region41: #{tpu_custom_call.1} parent=27 // pred_check
          %p278 = pneg %p113
        $region42: #{tpu_custom_call.1} parent=27 // pred_check_branch
          %280 = sbr.rel (%p278) target = $region44
        $region43: #{tpu_custom_call.1} parent=27 // pred_region
          %s282 = ssub.s32 128, 128
          %283 = vsyncadd %s269, %s282
          %s284 = smul.addr %s32, 2
          %s285 = sadd.s32 %s31, %s284
          %s286 = smul.addr %s285, 128
          %s287 = scalar_lea.hbm %s2, %s286
          %s289 = sshll.u32 %s272, 4
          %s290 = int_to_ptr.vmem [resolvable:$true] %s289
          %292 = dma.vmem_to_hbm [thread:$0]  %s290, 128, %s287, %s269
        $region44: #{tpu_custom_call.1} parent=27 // pred_fallthru
          _
        // Predicated region
        $region45: #{tpu_custom_call.1} parent=27 // pred_check
          %p293 = pneg %p139
        $region46: #{tpu_custom_call.1} parent=27 // pred_check_branch
          %295 = sbr.rel (%p293) target = $region48
        $region47: #{tpu_custom_call.1} parent=27 // pred_region
          %s297 = ssub.s32 128, 128
          %298 = vsyncadd %s274, %s297
          %s299 = smul.addr %s31, 128
          %s300 = scalar_lea.hbm %s3, %s299
          %s302 = sshll.u32 %s277, 4
          %s303 = int_to_ptr.vmem [resolvable:$true] %s302
          %305 = dma.vmem_to_hbm [thread:$0]  %s303, 128, %s300, %s274
        $region48: #{tpu_custom_call.1} parent=27 // pred_fallthru
          _
      $region28: #{tpu_custom_call.1} parent=5 // pred_fallthru
        _
      %p306 = scmp.le.s32.totalorder 2, %s22
      // Predicated region
      $region49: #{tpu_custom_call.1} parent=5 // pred_check
        %p307 = pneg %p306
      $region50: #{tpu_custom_call.1} parent=5 // pred_check_branch
        %309 = sbr.rel (%p307) target = $region52
      $region51: #{tpu_custom_call.1} parent=5 // pred_region
        %s310 = ssub.s32 %s22, 2
        // Predicated region
        $region53: #{tpu_custom_call.1} parent=51 // pred_check
          %p311 = pneg %p119
        $region54: #{tpu_custom_call.1} parent=51 // pred_check_branch
          %313 = sbr.rel (%p311) target = $region56
        $region55: #{tpu_custom_call.1} parent=51 // pred_region
          %s314 = sand.u32 %s104, 1
          %s315 = scalar_lea.sflag [#allocation4], %s314
          %s316 = sand.u32 %s104, 1
          %s317 = smul.addr %s316, 8
          %s318 = scalar_lea.vmem [#allocation7], %s317
          %319 = dma.done %s315, 128
        $region56: #{tpu_custom_call.1} parent=51 // pred_fallthru
          _
        // Predicated region
        $region57: #{tpu_custom_call.1} parent=51 // pred_check
          %p320 = pneg %p145
        $region58: #{tpu_custom_call.1} parent=51 // pred_check_branch
          %322 = sbr.rel (%p320) target = $region60
        $region59: #{tpu_custom_call.1} parent=51 // pred_region
          %s323 = sand.u32 %s130, 1
          %s324 = scalar_lea.sflag [#allocation9], %s323
          %s325 = sand.u32 %s130, 1
          %s326 = smul.addr %s325, 8
          %s327 = scalar_lea.vmem [#allocation8], %s326
          %328 = dma.done %s324, 128
        $region60: #{tpu_custom_call.1} parent=51 // pred_fallthru
          _
      $region52: #{tpu_custom_call.1} parent=5 // pred_fallthru
        _
    $region6: #{tpu_custom_call.1} parent=1 // loop_footer
      %s26 = sadd.s32 1, %s22
    $region7: #{tpu_custom_call.1} parent=1 // loop_footer_branch
      %21 = sbr.rel target = $region3
    $region8: #{tpu_custom_call.1} parent=1 // loop_exit
      _
    %329 = vsyncpa [#allocation3], 1
    %s330 = scalar_lea.sflag [#allocation3], 1
    %331 = vsyncpa %s330, 1
    %332 = vsyncpa [#allocation6], 1
    %s333 = scalar_lea.sflag [#allocation6], 1
    %334 = vsyncpa %s333, 1
    %335 = vsyncpa [#allocation4], 1
    %s336 = scalar_lea.sflag [#allocation4], 1
    %337 = vsyncpa %s336, 1
    %338 = vsyncpa [#allocation9], 1
    %s339 = scalar_lea.sflag [#allocation9], 1
    %340 = vsyncpa %s339, 1

</llo_original>
